<compile_context>
chip_gen: v7x
topology: tpu7x:2x2x1
jax: 0.10.0
libtpu: 0.0.40
codegen_flags: <defaults>
</compile_context>

<pallas_src>
import functools
import math

import jax
import jax.numpy as jnp
import numpy as np
from jax.experimental import pallas as pl
from jax.experimental.pallas import tpu as pltpu

EXACT_PYTORCH_ALIASING = True
COMPUTE_DTYPE = jnp.float32     # MXU input dtype (accumulation is always f32)


def _reflect_idx(s, d):
    """PyTorch ReflectionPad2d index mapping for a source coordinate s in [-p, d-1+p]."""
    if s < 0:
        return -s
    if s >= d:
        return 2 * (d - 1) - s
    return s


# ============================================================================
# Path 1: lane-packed banded-matmul kernel (small channel counts, e.g. C=8)
# ============================================================================
def _pad_rows_packed(x, p):
    """(Bblk, H, W*C) -> (Bblk, H+2p, W*C); per-image row reflection (PyTorch)."""
    if p == 0:
        return x
    H = x.shape[1]
    top = [x[:, i:i + 1, :] for i in range(p, 0, -1)]            # rows p .. 1
    bot = [x[:, H - 2 - i:H - 1 - i, :] for i in range(p)]       # rows H-2, H-3, ...
    return jnp.concatenate(top + [x] + bot, axis=1)


def _packed_conv(xin, band_ref, bias_ref, *, K, H, pad):
    """Reflect-padded KxK conv on lane-packed (Bblk, H, W*Cin) -> (Bblk*H, W*Cout) f32.

    The kw taps and the W-edge reflection live inside the (W*Cin, W*Cout) band
    matrices (one per kh), so the only in-kernel data movement is K sublane-row
    shifts; all vector work is 128-lane dense and each conv is K MXU matmuls.
    """
    Bblk, _, WCi = xin.shape
    xp = _pad_rows_packed(xin, pad)                              # (Bblk, H+2p, WCi)
    acc = None
    for kh in range(K):
        a = xp[:, kh:kh + H, :].reshape(Bblk * H, WCi)           # row tap, M = Bblk*H
        t = jnp.dot(a, band_ref[kh], preferred_element_type=jnp.float32)
        acc = t if acc is None else acc + t
    return acc + bias_ref[...]                                   # (1, W*Cout) broadcast


def _res_block_packed_kernel(x_ref, band1_ref, b1_ref, band2_ref, b2_ref, o_ref,
                             *, K, H, pad, post_scale, add_residual, compute_dtype):
    """x_ref: (Bblk, H, W*Cin); bands: (K, W*Ci, W*Co); biases: (1, W*Co);
       o_ref: (Bblk, H, W*Cout) lane-dense output."""
    Bblk = x_ref.shape[0]
    WCmid = band1_ref.shape[-1]
    WCout = band2_ref.shape[-1]

    x = x_ref[...]                                               # already compute_dtype
    h = _packed_conv(x, band1_ref, b1_ref, K=K, H=H, pad=pad)    # conv1 + bias, f32
    h = jnp.maximum(h, 0.0)                                      # ReLU
    h = h.reshape(Bblk, H, WCmid).astype(compute_dtype)          # stays in VMEM

    y = _packed_conv(h, band2_ref, b2_ref, K=K, H=H, pad=pad)    # conv2 + bias, f32
    if add_residual:
        y = y + x.reshape(Bblk * H, -1).astype(jnp.float32)      # conventional residual
    else:
        y = post_scale * y                                       # exact dict-aliasing: 2*conv2(...)
    o_ref[...] = y.reshape(Bblk, H, WCout).astype(o_ref.dtype)   # lane-dense store


def _band_matrices(w, W, pad):
    """Fold kw taps + W-edge reflection of a KxK conv into K (W*Ci, W*Co) band matrices.

    band[kh, p*Ci + c, q*Co + o] = sum_kw [p == reflect(q + kw - pad)] * w[kh, kw, c, o]
    Built once per call in the wrapper (precompute per layer in a real network).
    """
    K, _, Ci, Co = w.shape
    sel = np.zeros((K, W, W), np.float32)                        # sel[kw, src_col, out_col]
    for kw in range(K):
        for j in range(W):
            sel[kw, _reflect_idx(j + kw - pad, W), j] += 1.0
    band = jnp.einsum("kpq,hkco->hpcqo", jnp.asarray(sel), w.astype(jnp.float32))
    return band.reshape(K, W * Ci, W * Co)


# ============================================================================
# Path 2: NHWC per-kh accumulation kernel (production channel counts, C >= 128)
# ============================================================================
def _reflect_pad_hw(x, p):
    """(H, W, C) -> (H+2p, W+2p, C), PyTorch ReflectionPad2d semantics (p < min(H, W))."""
    if p == 0:
        return x
    H, W = x.shape[0], x.shape[1]
    top = [x[i:i + 1] for i in range(p, 0, -1)]
    bot = [x[H - 2 - i:H - 1 - i] for i in range(p)]
    xr = jnp.concatenate(top + [x] + bot, axis=0)
    left = [xr[:, j:j + 1] for j in range(p, 0, -1)]
    right = [xr[:, W - 2 - j:W - 1 - j] for j in range(p)]
    return jnp.concatenate(left + [xr] + right, axis=1)


def _nhwc_conv(xin, w_ref, bias_ref, *, K, H, W, pad):
    """Reflect-padded KxK conv on (H, W, Ci) -> (H*W, Co) f32.

    Per-kh accumulation: contraction depth K*Ci (= 384 at Ci=128, >= 256 so it
    fills the v6e/v7x MXU) and no (H*W, K*K*Ci) im2col slab is materialized.
    With Ci = 128 every operand is lane-dense; the output (H*W, Co=128) too.
    """
    Ci = xin.shape[-1]
    xp = _reflect_pad_hw(xin, pad)                               # (H+2p, W+2p, Ci)
    acc = None
    for kh in range(K):
        slab = jnp.concatenate([xp[kh:kh + H, kw:kw + W, :] for kw in range(K)],
                               axis=-1).reshape(H * W, K * Ci)
        t = jnp.dot(slab, w_ref[kh], preferred_element_type=jnp.float32)
        acc = t if acc is None else acc + t
    return acc + bias_ref[...]


def _res_block_nhwc_kernel(x_ref, w1_ref, b1_ref, w2_ref, b2_ref, o_ref,
                           *, K, H, W, pad, post_scale, add_residual, compute_dtype):
    """x_ref: (H, W, Cin); w*: (K, K*Ci, Co); b*: (1, Co); o_ref: (H*W, Cout)."""
    Cmid = w1_ref.shape[-1]
    x = x_ref[...]
    h = jnp.maximum(_nhwc_conv(x, w1_ref, b1_ref, K=K, H=H, W=W, pad=pad), 0.0)
    h = h.reshape(H, W, Cmid).astype(compute_dtype)              # h never leaves VMEM
    y = _nhwc_conv(h, w2_ref, b2_ref, K=K, H=H, W=W, pad=pad)
    if add_residual:
        y = y + x.reshape(H * W, -1).astype(jnp.float32)
    else:
        y = post_scale * y
    o_ref[...] = y.astype(o_ref.dtype)                           # (H*W, Cout) lane-dense


# ============================================================================
# Wrappers
# ============================================================================
def _is_multi_core_tpu():
    """True on v7x-class chips (2 TensorCores); conservative False otherwise."""
    try:
        kind = jax.devices()[0].device_kind.lower()
    except Exception:
        return False
    return ("v7" in kind) or ("7x" in kind)


def residual_block_forward_nhwc(x_nhwc, params, *,
                                exact_pytorch_aliasing=EXACT_PYTORCH_ALIASING,
                                compute_dtype=COMPUTE_DTYPE,
                                batch_grid=None,
                                vmem_limit_bytes=None):
    """ResidualBlock.forward on NHWC activations (the layout to keep across a network).

    params = (w1, b1, w2, b2) with conv weights in HWIO layout:
        w1: (K, K, C, Cmid)  b1: (Cmid,)  w2: (K, K, Cmid, Cout)  b2: (Cout,)
    """
    w1, b1, w2, b2 = params
    B, H, W, C = x_nhwc.shape
    K = w1.shape[0]
    assert w1.shape[1] == K and K % 2 == 1, "odd square kernel expected"
    assert w1.shape[2] == C and w2.shape[2] == w1.shape[3]
    Cmid, Cout = w1.shape[3], w2.shape[3]
    pad = (K - 1) // 2                        # same_padding() for stride=1, odd K
    assert pad < H and pad < W
    if not exact_pytorch_aliasing:
        assert Cout == C, "conventional residual needs matching channels"

    post_scale = 2.0 if exact_pytorch_aliasing else 1.0
    add_residual = not exact_pytorch_aliasing

    flops = 2 * B * H * W * K * K * (C * Cmid + Cmid * Cout)     # nominal conv flops
    out_bytes = B * H * W * Cout * 4
    cp_kwargs = dict(dimension_semantics=("parallel",))
    if vmem_limit_bytes is not None:
        cp_kwargs["vmem_limit_bytes"] = vmem_limit_bytes

    # Banded lane-packed path pays off while channels are narrower than a vreg
    # (and the (W*Ci, W*Co) band matrices stay small).
    use_packed = (max(C, Cmid, Cout) < 128) and (W * max(C, Cmid, Cout) <= 1024)

    if use_packed:
        if batch_grid is None:
            # v7x: keep a per-image "parallel" grid axis so both TensorCores work.
            # v5e/v6e (single TC): fold B into matmul M -> one grid step, no
            # per-step overhead, larger matmul M.
            batch_grid = _is_multi_core_tpu() and B > 1
        G = B if batch_grid else 1
        Bblk = B // G

        x_packed = x_nhwc.reshape(B, H, W * C).astype(compute_dtype)   # lane-dense pack
        band1 = _band_matrices(w1, W, pad).astype(compute_dtype)
        band2 = _band_matrices(w2, W, pad).astype(compute_dtype)
        b1p = jnp.tile(b1.astype(jnp.float32), W).reshape(1, W * Cmid)
        b2p = jnp.tile(b2.astype(jnp.float32), W).reshape(1, W * Cout)

        in_bytes = (x_packed.size * x_packed.dtype.itemsize
                    + band1.size * band1.dtype.itemsize
                    + band2.size * band2.dtype.itemsize
                    + (b1p.size + b2p.size) * 4)
        kernel = functools.partial(
            _res_block_packed_kernel, K=K, H=H, pad=pad, post_scale=post_scale,
            add_residual=add_residual, compute_dtype=compute_dtype)

        out = pl.pallas_call(
            kernel,
            out_shape=jax.ShapeDtypeStruct((B, H, W * Cout), x_nhwc.dtype),
            grid=(G,),
            in_specs=[
                pl.BlockSpec((Bblk, H, W * C), lambda g: (g, 0, 0)),
                pl.BlockSpec((K, W * C, W * Cmid), lambda g: (0, 0, 0)),
                pl.BlockSpec((1, W * Cmid), lambda g: (0, 0)),
                pl.BlockSpec((K, W * Cmid, W * Cout), lambda g: (0, 0, 0)),
                pl.BlockSpec((1, W * Cout), lambda g: (0, 0)),
            ],
            out_specs=pl.BlockSpec((Bblk, H, W * Cout), lambda g: (g, 0, 0)),
            compiler_params=pltpu.CompilerParams(**cp_kwargs),
            cost_estimate=pl.CostEstimate(flops=int(flops), transcendentals=0,
                                          bytes_accessed=int(in_bytes + out_bytes)),
        )(x_packed, band1, b1p, band2, b2p)
        return out.reshape(B, H, W, Cout)

    # ---------------- large-channel path (C >= 128): per-kh accumulation ----
    # TODO(synk): for production image sizes (e.g. 128x128x128) add an H
    #   row-tile grid axis with a `pad`-row halo (overlapping index_map) and an
    #   explicit vmem_limit_bytes so each step stays within a few MB of VMEM.
    x = x_nhwc.astype(compute_dtype)
    w1f = w1.reshape(K, K * C, Cmid).astype(compute_dtype)        # (kh, kw*Ci+c, o)
    w2f = w2.reshape(K, K * Cmid, Cout).astype(compute_dtype)
    b1r = b1.reshape(1, Cmid).astype(jnp.float32)
    b2r = b2.reshape(1, Cout).astype(jnp.float32)
    in_bytes = (x.size * x.dtype.itemsize
                + w1f.size * w1f.dtype.itemsize
                + w2f.size * w2f.dtype.itemsize + (Cmid + Cout) * 4)
    kernel = functools.partial(
        _res_block_nhwc_kernel, K=K, H=H, W=W, pad=pad, post_scale=post_scale,
        add_residual=add_residual, compute_dtype=compute_dtype)

    out = pl.pallas_call(
        kernel,
        out_shape=jax.ShapeDtypeStruct((B, H * W, Cout), x_nhwc.dtype),
        grid=(B,),
        in_specs=[
            pl.BlockSpec((None, H, W, C), lambda b: (b, 0, 0, 0)),
            pl.BlockSpec((K, K * C, Cmid), lambda b: (0, 0, 0)),
            pl.BlockSpec((1, Cmid), lambda b: (0, 0)),
            pl.BlockSpec((K, K * Cmid, Cout), lambda b: (0, 0, 0)),
            pl.BlockSpec((1, Cout), lambda b: (0, 0)),
        ],
        out_specs=pl.BlockSpec((None, H * W, Cout), lambda b: (b, 0, 0)),
        compiler_params=pltpu.CompilerParams(**cp_kwargs),
        cost_estimate=pl.CostEstimate(flops=int(flops), transcendentals=0,
                                      bytes_accessed=int(in_bytes + out_bytes)),
    )(x, w1f, b1r, w2f, b2r)
    return out.reshape(B, H, W, Cout)


def residual_block_forward(x_nchw, params, **kwargs):
    """ResidualBlock.forward with the PyTorch (B, C, H, W) interface.

    NOTE: when chaining blocks, call residual_block_forward_nhwc directly and
    keep activations NHWC across the network -- these two transposes are full
    HBM round trips and should only happen at model entry/exit.
    """
    x = jnp.transpose(x_nchw, (0, 2, 3, 1))
    y = residual_block_forward_nhwc(x, params, **kwargs)
    return jnp.transpose(y, (0, 3, 1, 2))


# ============================================================================
# Pure-JAX reference (lax.conv, f32, HIGHEST precision) for correctness checks
# ============================================================================
def _ref_forward(x_nchw, params, exact=True):
    w1, b1, w2, b2 = params
    x = jnp.transpose(x_nchw, (0, 2, 3, 1)).astype(jnp.float32)

    def conv(xin, w, b):
        K = w.shape[0]
        p = (K - 1) // 2
        xpad = jnp.pad(xin, ((0, 0), (p, p), (p, p), (0, 0)), mode="reflect")
        y = jax.lax.conv_general_dilated(
            xpad, w.astype(jnp.float32), window_strides=(1, 1), padding="VALID",
            dimension_numbers=("NHWC", "HWIO", "NHWC"),
            precision=jax.lax.Precision.HIGHEST,
            preferred_element_type=jnp.float32)
        return y + b

    h = jnp.maximum(conv(x, w1, b1), 0.0)
    y = conv(h, w2, b2)
    out = 2.0 * y if exact else y + x
    return jnp.transpose(out, (0, 3, 1, 2))


if __name__ == "__main__":
    key = jax.random.PRNGKey(0)

    def make_case(k, B, C, S, K):
        kx, kw1, kb1, kw2, kb2 = jax.random.split(k, 5)
        bound = 1.0 / math.sqrt(C * K * K)          # PyTorch Conv2d default init bound
        w1 = jax.random.uniform(kw1, (K, K, C, C), jnp.float32, -bound, bound)
        b1 = jax.random.uniform(kb1, (C,), jnp.float32, -bound, bound)
        w2 = jax.random.uniform(kw2, (K, K, C, C), jnp.float32, -bound, bound)
        b2 = jax.random.uniform(kb2, (C,), jnp.float32, -bound, bound)
        x = jax.random.normal(kx, (B, C, S, S), jnp.float32)
        return x, (w1, b1, w2, b2)

    fwd = jax.jit(residual_block_forward)
    k1, k2 = jax.random.split(key)

    # Case 1: small channels -> lane-packed banded path (W*C = 128 lanes exactly).
    x1, p1 = make_case(k1, B=2, C=8, S=16, K=3)
    out1 = jax.block_until_ready(fwd(x1, p1))
    assert out1.shape == x1.shape
    ref1 = _ref_forward(x1, p1, EXACT_PYTORCH_ALIASING)
    np.testing.assert_allclose(np.asarray(out1), np.asarray(ref1), rtol=2e-2, atol=2e-2)

    # Case 2: production channel count -> NHWC per-kh path (Cin = Cout = 128).
    x2, p2 = make_case(k2, B=1, C=128, S=8, K=3)
    out2 = jax.block_until_ready(fwd(x2, p2))
    assert out2.shape == x2.shape
    ref2 = _ref_forward(x2, p2, EXACT_PYTORCH_ALIASING)
    np.testing.assert_allclose(np.asarray(out2), np.asarray(ref2), rtol=2e-2, atol=2e-2)

    print("KERNEL_OK")
</pallas_src>

<mosaic_0001>
module attributes {stable_mosaic.version = 11 : i64} {
  func.func @_res_block_packed_kernel(%arg0: i32, %arg1: memref<2x16x128xf32, #tpu.memory_space<vmem>>, %arg2: memref<3x128x128xf32, #tpu.memory_space<vmem>>, %arg3: memref<1x128xf32, #tpu.memory_space<vmem>>, %arg4: memref<3x128x128xf32, #tpu.memory_space<vmem>>, %arg5: memref<1x128xf32, #tpu.memory_space<vmem>>, %arg6: memref<2x16x128xf32, #tpu.memory_space<vmem>>) attributes {dimension_semantics = [#tpu.dimension_semantics<parallel>], iteration_bounds = array<i64: 1>, scalar_prefetch = 0 : i64, scratch_operands = 0 : i64, tpu.core_type = #tpu.core_type<tc>, window_params = [{transform_indices = @transform_0, window_bounds = array<i64: 2, 16, 128>}, {pipeline_mode = #tpu.pipeline_mode<synchronous>, transform_indices = @transform_1, window_bounds = array<i64: 3, 128, 128>}, {pipeline_mode = #tpu.pipeline_mode<synchronous>, transform_indices = @transform_2, window_bounds = array<i64: 1, 128>}, {pipeline_mode = #tpu.pipeline_mode<synchronous>, transform_indices = @transform_3, window_bounds = array<i64: 3, 128, 128>}, {pipeline_mode = #tpu.pipeline_mode<synchronous>, transform_indices = @transform_4, window_bounds = array<i64: 1, 128>}, {transform_indices = @transform_5, window_bounds = array<i64: 2, 16, 128>}]} {
    %c0 = arith.constant 0 : index
    %c0_0 = arith.constant 0 : index
    %c0_1 = arith.constant 0 : index
    %0 = vector.load %arg1[%c0, %c0_0, %c0_1] : memref<2x16x128xf32, #tpu.memory_space<vmem>>, vector<2x16x128xf32>
    %1 = vector.extract_strided_slice %0 {offsets = [0, 1, 0], sizes = [2, 1, 128], strides = [1, 1, 1]} : vector<2x16x128xf32> to vector<2x1x128xf32>
    %2 = vector.extract_strided_slice %0 {offsets = [0, 14, 0], sizes = [2, 1, 128], strides = [1, 1, 1]} : vector<2x16x128xf32> to vector<2x1x128xf32>
    %3 = tpu.concatenate %1, %0, %2 in 1 : vector<2x1x128xf32>, vector<2x16x128xf32>, vector<2x1x128xf32> -> vector<2x18x128xf32>
    %4 = vector.extract_strided_slice %3 {offsets = [0, 0, 0], sizes = [2, 16, 128], strides = [1, 1, 1]} : vector<2x18x128xf32> to vector<2x16x128xf32>
    %5 = vector.shape_cast %4 : vector<2x16x128xf32> to vector<32x128xf32>
    %c0_2 = arith.constant 0 : index
    %c0_3 = arith.constant 0 : index
    %c0_4 = arith.constant 0 : index
    %6 = vector.load %arg2[%c0_2, %c0_3, %c0_4] : memref<3x128x128xf32, #tpu.memory_space<vmem>>, vector<1x128x128xf32>
    %7 = vector.shape_cast %6 : vector<1x128x128xf32> to vector<128x128xf32>
    %cst = arith.constant dense<0.000000e+00> : vector<32x128xf32>
    %8 = tpu.matmul %5, %7, %cst {dimension_numbers = #tpu.dot_dimension_numbers<[1], [0], [0], [1], [0, 0, 1, 1], [], []>} : vector<32x128xf32>, vector<128x128xf32>, vector<32x128xf32> -> vector<32x128xf32>
    %9 = vector.extract_strided_slice %3 {offsets = [0, 1, 0], sizes = [2, 16, 128], strides = [1, 1, 1]} : vector<2x18x128xf32> to vector<2x16x128xf32>
    %10 = vector.shape_cast %9 : vector<2x16x128xf32> to vector<32x128xf32>
    %c1 = arith.constant 1 : index
    %c0_5 = arith.constant 0 : index
    %c0_6 = arith.constant 0 : index
    %11 = vector.load %arg2[%c1, %c0_5, %c0_6] : memref<3x128x128xf32, #tpu.memory_space<vmem>>, vector<1x128x128xf32>
    %12 = vector.shape_cast %11 : vector<1x128x128xf32> to vector<128x128xf32>
    %cst_7 = arith.constant dense<0.000000e+00> : vector<32x128xf32>
    %13 = tpu.matmul %10, %12, %cst_7 {dimension_numbers = #tpu.dot_dimension_numbers<[1], [0], [0], [1], [0, 0, 1, 1], [], []>} : vector<32x128xf32>, vector<128x128xf32>, vector<32x128xf32> -> vector<32x128xf32>
    %14 = arith.addf %8, %13 : vector<32x128xf32>
    %15 = vector.extract_strided_slice %3 {offsets = [0, 2, 0], sizes = [2, 16, 128], strides = [1, 1, 1]} : vector<2x18x128xf32> to vector<2x16x128xf32>
    %16 = vector.shape_cast %15 : vector<2x16x128xf32> to vector<32x128xf32>
    %c2 = arith.constant 2 : index
    %c0_8 = arith.constant 0 : index
    %c0_9 = arith.constant 0 : index
    %17 = vector.load %arg2[%c2, %c0_8, %c0_9] : memref<3x128x128xf32, #tpu.memory_space<vmem>>, vector<1x128x128xf32>
    %18 = vector.shape_cast %17 : vector<1x128x128xf32> to vector<128x128xf32>
    %cst_10 = arith.constant dense<0.000000e+00> : vector<32x128xf32>
    %19 = tpu.matmul %16, %18, %cst_10 {dimension_numbers = #tpu.dot_dimension_numbers<[1], [0], [0], [1], [0, 0, 1, 1], [], []>} : vector<32x128xf32>, vector<128x128xf32>, vector<32x128xf32> -> vector<32x128xf32>
    %20 = arith.addf %14, %19 : vector<32x128xf32>
    %c0_11 = arith.constant 0 : index
    %c0_12 = arith.constant 0 : index
    %21 = vector.load %arg3[%c0_11, %c0_12] : memref<1x128xf32, #tpu.memory_space<vmem>>, vector<1x128xf32>
    %22 = vector.broadcast %21 : vector<1x128xf32> to vector<32x128xf32>
    %23 = arith.addf %20, %22 : vector<32x128xf32>
    %cst_13 = arith.constant 0.000000e+00 : f32
    %24 = vector.broadcast %cst_13 : f32 to vector<32x128xf32>
    %25 = arith.maximumf %23, %24 : vector<32x128xf32>
    %26 = vector.shape_cast %25 : vector<32x128xf32> to vector<2x16x128xf32>
    %27 = vector.extract_strided_slice %26 {offsets = [0, 1, 0], sizes = [2, 1, 128], strides = [1, 1, 1]} : vector<2x16x128xf32> to vector<2x1x128xf32>
    %28 = vector.extract_strided_slice %26 {offsets = [0, 14, 0], sizes = [2, 1, 128], strides = [1, 1, 1]} : vector<2x16x128xf32> to vector<2x1x128xf32>
    %29 = tpu.concatenate %27, %26, %28 in 1 : vector<2x1x128xf32>, vector<2x16x128xf32>, vector<2x1x128xf32> -> vector<2x18x128xf32>
    %30 = vector.extract_strided_slice %29 {offsets = [0, 0, 0], sizes = [2, 16, 128], strides = [1, 1, 1]} : vector<2x18x128xf32> to vector<2x16x128xf32>
    %31 = vector.shape_cast %30 : vector<2x16x128xf32> to vector<32x128xf32>
    %c0_14 = arith.constant 0 : index
    %c0_15 = arith.constant 0 : index
    %c0_16 = arith.constant 0 : index
    %32 = vector.load %arg4[%c0_14, %c0_15, %c0_16] : memref<3x128x128xf32, #tpu.memory_space<vmem>>, vector<1x128x128xf32>
    %33 = vector.shape_cast %32 : vector<1x128x128xf32> to vector<128x128xf32>
    %cst_17 = arith.constant dense<0.000000e+00> : vector<32x128xf32>
    %34 = tpu.matmul %31, %33, %cst_17 {dimension_numbers = #tpu.dot_dimension_numbers<[1], [0], [0], [1], [0, 0, 1, 1], [], []>} : vector<32x128xf32>, vector<128x128xf32>, vector<32x128xf32> -> vector<32x128xf32>
    %35 = vector.extract_strided_slice %29 {offsets = [0, 1, 0], sizes = [2, 16, 128], strides = [1, 1, 1]} : vector<2x18x128xf32> to vector<2x16x128xf32>
    %36 = vector.shape_cast %35 : vector<2x16x128xf32> to vector<32x128xf32>
    %c1_18 = arith.constant 1 : index
    %c0_19 = arith.constant 0 : index
    %c0_20 = arith.constant 0 : index
    %37 = vector.load %arg4[%c1_18, %c0_19, %c0_20] : memref<3x128x128xf32, #tpu.memory_space<vmem>>, vector<1x128x128xf32>
    %38 = vector.shape_cast %37 : vector<1x128x128xf32> to vector<128x128xf32>
    %cst_21 = arith.constant dense<0.000000e+00> : vector<32x128xf32>
    %39 = tpu.matmul %36, %38, %cst_21 {dimension_numbers = #tpu.dot_dimension_numbers<[1], [0], [0], [1], [0, 0, 1, 1], [], []>} : vector<32x128xf32>, vector<128x128xf32>, vector<32x128xf32> -> vector<32x128xf32>
    %40 = arith.addf %34, %39 : vector<32x128xf32>
    %41 = vector.extract_strided_slice %29 {offsets = [0, 2, 0], sizes = [2, 16, 128], strides = [1, 1, 1]} : vector<2x18x128xf32> to vector<2x16x128xf32>
    %42 = vector.shape_cast %41 : vector<2x16x128xf32> to vector<32x128xf32>
    %c2_22 = arith.constant 2 : index
    %c0_23 = arith.constant 0 : index
    %c0_24 = arith.constant 0 : index
    %43 = vector.load %arg4[%c2_22, %c0_23, %c0_24] : memref<3x128x128xf32, #tpu.memory_space<vmem>>, vector<1x128x128xf32>
    %44 = vector.shape_cast %43 : vector<1x128x128xf32> to vector<128x128xf32>
    %cst_25 = arith.constant dense<0.000000e+00> : vector<32x128xf32>
    %45 = tpu.matmul %42, %44, %cst_25 {dimension_numbers = #tpu.dot_dimension_numbers<[1], [0], [0], [1], [0, 0, 1, 1], [], []>} : vector<32x128xf32>, vector<128x128xf32>, vector<32x128xf32> -> vector<32x128xf32>
    %46 = arith.addf %40, %45 : vector<32x128xf32>
    %c0_26 = arith.constant 0 : index
    %c0_27 = arith.constant 0 : index
    %47 = vector.load %arg5[%c0_26, %c0_27] : memref<1x128xf32, #tpu.memory_space<vmem>>, vector<1x128xf32>
    %48 = vector.broadcast %47 : vector<1x128xf32> to vector<32x128xf32>
    %49 = arith.addf %46, %48 : vector<32x128xf32>
    %cst_28 = arith.constant 2.000000e+00 : f32
    %50 = vector.broadcast %cst_28 : f32 to vector<32x128xf32>
    %51 = arith.mulf %50, %49 : vector<32x128xf32>
    %52 = vector.shape_cast %51 : vector<32x128xf32> to vector<2x16x128xf32>
    %c0_29 = arith.constant 0 : index
    %c0_30 = arith.constant 0 : index
    %c0_31 = arith.constant 0 : index
    %53 = vector.load %arg6[%c0_29, %c0_30, %c0_31] : memref<2x16x128xf32, #tpu.memory_space<vmem>>, vector<2x16x128xf32>
    tpu.vector_store %arg6[%c0_29, %c0_30, %c0_31], %52 {strides = array<i32>} : memref<2x16x128xf32, #tpu.memory_space<vmem>>, vector<2x16x128xf32>,
    return
  }
  func.func @transform_0(%arg0: i32) -> (i32, i32, i32) {
    %c0_i32 = arith.constant 0 : i32
    %c0_i32_0 = arith.constant 0 : i32
    %c0_i32_1 = arith.constant 0 : i32
    return %arg0, %c0_i32, %c0_i32_0 : i32, i32, i32
  }
  func.func @transform_1(%arg0: i32) -> (i32, i32, i32) {
    %c0_i32 = arith.constant 0 : i32
    %c0_i32_0 = arith.constant 0 : i32
    %c0_i32_1 = arith.constant 0 : i32
    %c0_i32_2 = arith.constant 0 : i32
    return %c0_i32, %c0_i32_0, %c0_i32_1 : i32, i32, i32
  }
  func.func @transform_2(%arg0: i32) -> (i32, i32) {
    %c0_i32 = arith.constant 0 : i32
    %c0_i32_0 = arith.constant 0 : i32
    %c0_i32_1 = arith.constant 0 : i32
    return %c0_i32, %c0_i32_0 : i32, i32
  }
  func.func @transform_3(%arg0: i32) -> (i32, i32, i32) {
    %c0_i32 = arith.constant 0 : i32
    %c0_i32_0 = arith.constant 0 : i32
    %c0_i32_1 = arith.constant 0 : i32
    %c0_i32_2 = arith.constant 0 : i32
    return %c0_i32, %c0_i32_0, %c0_i32_1 : i32, i32, i32
  }
  func.func @transform_4(%arg0: i32) -> (i32, i32) {
    %c0_i32 = arith.constant 0 : i32
    %c0_i32_0 = arith.constant 0 : i32
    %c0_i32_1 = arith.constant 0 : i32
    return %c0_i32, %c0_i32_0 : i32, i32
  }
  func.func @transform_5(%arg0: i32) -> (i32, i32, i32) {
    %c0_i32 = arith.constant 0 : i32
    %c0_i32_0 = arith.constant 0 : i32
    %c0_i32_1 = arith.constant 0 : i32
    return %arg0, %c0_i32, %c0_i32_0 : i32, i32, i32
  }
}

</mosaic_0001>

<llo_original>
// kernel: tile.13
$region0: #{tile.13}
  #allocation0 [shape = 's32[1]{0}', space=sflag, size = 0x4, scoped, tag = 'scoped memory for tile.13']
  %s0 = inlined_call_operand.vmem [shape: f32[8], index: 0, kind: input, shape index: {}]
  %s1 = inlined_call_operand.vmem [shape: f32[16,8], index: 1, kind: output, shape index: {}]
  // Predicated region
  $region2: #{tile.13} parent=0 // pred_check
    _
  $region3: #{tile.13} parent=0 // pred_check_branch
    %3 = sbr.rel (0) target = $region5
  $region4: #{tile.13} parent=0 // pred_region
    _
  $region5: #{tile.13} parent=0 // pred_fallthru
    _
  %v4 = vld [vmem:[%s0] ss:$0 sm:$0xff]
  %5 = vst [vmem:[%s1] sm:$0xff] %v4
  %s6 = scalar_lea.vmem %s1, 8
  %7 = vst [vmem:[%s6] sm:$0xff] %v4

// kernel: tile.14
$region0: #{tile.14}
  %s0 = inlined_call_operand.vmem [shape: f32[16,8], index: 0, kind: input, shape index: {}]
  %s1 = inlined_call_operand.vmem [shape: f32[1,128], index: 1, kind: output, shape index: {}]
  $region1: #{tile.14} parent=0
    #allocation0 [shape = 'u8[4096]{0}', space=vmem, size = 0x1000, scoped, tag = 'scoped mem for output reshape']
    %v2 = vld [vmem:[%s0] sm:$0x1]
    %vm3 = vcmask 64512
    %4 = vst.msk [vmem:[#allocation0] sm:$0x1] %vm3, %v2
    %s5 = scalar_lea.vmem %s0, 15
    %v6 = vld [vmem:[%s5] sm:$0x1]
    %7 = vrot.lane.b32.xlu0 %v6, 120
    %v8 = vpop.permute.xlu0 %7
    %vm9 = vcmask 1048512
    %10 = vst.msk [vmem:[#allocation0] sm:$0x1] %vm9, %v8
    %s11 = scalar_lea.vmem %s0, 14
    %v12 = vld [vmem:[%s11] sm:$0x1]
    %13 = vrot.lane.b32.xlu0 %v12, 112
    %v14 = vpop.permute.xlu0 %13
    %vm15 = vcmask 982912
    %16 = vst.msk [vmem:[#allocation0] sm:$0x1] %vm15, %v14
    %s17 = scalar_lea.vmem %s0, 13
    %v18 = vld [vmem:[%s17] sm:$0x1]
    %19 = vrot.lane.b32.xlu0 %v18, 104
    %v20 = vpop.permute.xlu0 %19
    %vm21 = vcmask 917312
    %22 = vst.msk [vmem:[#allocation0] sm:$0x1] %vm21, %v20
    %s23 = scalar_lea.vmem %s0, 12
    %v24 = vld [vmem:[%s23] sm:$0x1]
    %25 = vrot.lane.b32.xlu0 %v24, 96
    %v26 = vpop.permute.xlu0 %25
    %vm27 = vcmask 851712
    %28 = vst.msk [vmem:[#allocation0] sm:$0x1] %vm27, %v26
    %s29 = scalar_lea.vmem %s0, 11
    %v30 = vld [vmem:[%s29] sm:$0x1]
    %31 = vrot.lane.b32.xlu0 %v30, 88
    %v32 = vpop.permute.xlu0 %31
    %vm33 = vcmask 786112
    %34 = vst.msk [vmem:[#allocation0] sm:$0x1] %vm33, %v32
    %s35 = scalar_lea.vmem %s0, 10
    %v36 = vld [vmem:[%s35] sm:$0x1]
    %37 = vrot.lane.b32.xlu0 %v36, 80
    %v38 = vpop.permute.xlu0 %37
    %vm39 = vcmask 720512
    %40 = vst.msk [vmem:[#allocation0] sm:$0x1] %vm39, %v38
    %s41 = scalar_lea.vmem %s0, 9
    %v42 = vld [vmem:[%s41] sm:$0x1]
    %43 = vrot.lane.b32.xlu0 %v42, 72
    %v44 = vpop.permute.xlu0 %43
    %vm45 = vcmask 654912
    %46 = vst.msk [vmem:[#allocation0] sm:$0x1] %vm45, %v44
    %s47 = scalar_lea.vmem %s0, 8
    %v48 = vld [vmem:[%s47] sm:$0x1]
    %49 = vrot.lane.b32.xlu0 %v48, 64
    %v50 = vpop.permute.xlu0 %49
    %vm51 = vcmask 589312
    %52 = vst.msk [vmem:[#allocation0] sm:$0x1] %vm51, %v50
    %s53 = scalar_lea.vmem %s0, 7
    %v54 = vld [vmem:[%s53] sm:$0x1]
    %55 = vrot.lane.b32.xlu0 %v54, 56
    %v56 = vpop.permute.xlu0 %55
    %vm57 = vcmask 523712
    %58 = vst.msk [vmem:[#allocation0] sm:$0x1] %vm57, %v56
    %s59 = scalar_lea.vmem %s0, 6
    %v60 = vld [vmem:[%s59] sm:$0x1]
    %61 = vrot.lane.b32.xlu0 %v60, 48
    %v62 = vpop.permute.xlu0 %61
    %vm63 = vcmask 458112
    %64 = vst.msk [vmem:[#allocation0] sm:$0x1] %vm63, %v62
    %s65 = scalar_lea.vmem %s0, 5
    %v66 = vld [vmem:[%s65] sm:$0x1]
    %67 = vrot.lane.b32.xlu0 %v66, 40
    %v68 = vpop.permute.xlu0 %67
    %vm69 = vcmask 392512
    %70 = vst.msk [vmem:[#allocation0] sm:$0x1] %vm69, %v68
    %s71 = scalar_lea.vmem %s0, 4
    %v72 = vld [vmem:[%s71] sm:$0x1]
    %73 = vrot.lane.b32.xlu0 %v72, 32
    %v74 = vpop.permute.xlu0 %73
    %vm75 = vcmask 326912
    %76 = vst.msk [vmem:[#allocation0] sm:$0x1] %vm75, %v74
    %s77 = scalar_lea.vmem %s0, 3
    %v78 = vld [vmem:[%s77] sm:$0x1]
    %79 = vrot.lane.b32.xlu0 %v78, 24
    %v80 = vpop.permute.xlu0 %79
    %vm81 = vcmask 261312
    %82 = vst.msk [vmem:[#allocation0] sm:$0x1] %vm81, %v80
    %s83 = scalar_lea.vmem %s0, 2
    %v84 = vld [vmem:[%s83] sm:$0x1]
    %85 = vrot.lane.b32.xlu0 %v84, 16
    %v86 = vpop.permute.xlu0 %85
    %vm87 = vcmask 195712
    %88 = vst.msk [vmem:[#allocation0] sm:$0x1] %vm87, %v86
    %s89 = scalar_lea.vmem %s0, 1
    %v90 = vld [vmem:[%s89] sm:$0x1]
    %91 = vrot.lane.b32.xlu0 %v90, 8
    %v92 = vpop.permute.xlu0 %91
    %vm93 = vcmask 130112
    %94 = vst.msk [vmem:[#allocation0] sm:$0x1] %vm93, %v92
    %s96 = sshllo.u32 0, 1
    %v98 = vld [vmem:[#allocation0] sm:%s96]
    %s99 = sshllo.u32 0, 1
    %100 = vst [vmem:[%s1] sm:%s99] %v98

// kernel: residual_block_forward.1
$region0: #{residual_block_forward.1}
  #allocation0 [shape = 'u32[]', space=smem, size = 0x4, offset = 0x4, fixed_abs, tag = 'smem constant byte address 0x4 - core index']
  #allocation1 [shape = 'u32[144,128]{1,0:T(1,128)}', space=vmem, size = 0x12000, scoped, tag = 'internal scratch']
  %s0 = inlined_call_operand.vmem [shape: f32[2,16,128], index: 0, kind: input, shape index: {}]
  %s1 = inlined_call_operand.vmem [shape: f32[3,128,128], index: 1, kind: input, shape index: {}]
  %s2 = inlined_call_operand.vmem [shape: f32[1,128], index: 2, kind: input, shape index: {}]
  %s3 = inlined_call_operand.vmem [shape: f32[3,128,128], index: 3, kind: input, shape index: {}]
  %s4 = inlined_call_operand.vmem [shape: f32[1,128], index: 4, kind: input, shape index: {}]
  %s5 = inlined_call_operand.vmem [shape: f32[2,16,128], index: 5, kind: output, shape index: {}]
  %s6 = sld [smem:[#allocation0]]
  $region30: #{residual_block_forward.1} parent=0
    _
  %s8 = ssub.s32 1, %s6
  %s9 = scalar_select 0, %s8, %s6
  // Predicated region
  $region2: #{residual_block_forward.1} parent=0 // pred_check
    _
  $region3: #{residual_block_forward.1} parent=0 // pred_check_branch
    %11 = sbr.rel (0) target = $region5
  $region4: #{residual_block_forward.1} parent=0 // pred_region
    _
  $region5: #{residual_block_forward.1} parent=0 // pred_fallthru
    _
  // Predicated region
  $region6: #{residual_block_forward.1} parent=0 // pred_check
    _
  $region7: #{residual_block_forward.1} parent=0 // pred_check_branch
    %13 = sbr.rel (0) target = $region9
  $region8: #{residual_block_forward.1} parent=0 // pred_region
    _
  $region9: #{residual_block_forward.1} parent=0 // pred_fallthru
    _
  // Predicated region
  $region10: #{residual_block_forward.1} parent=0 // pred_check
    _
  $region11: #{residual_block_forward.1} parent=0 // pred_check_branch
    %15 = sbr.rel (0) target = $region13
  $region12: #{residual_block_forward.1} parent=0 // pred_region
    _
  $region13: #{residual_block_forward.1} parent=0 // pred_fallthru
    _
  // Predicated region
  $region14: #{residual_block_forward.1} parent=0 // pred_check
    _
  $region15: #{residual_block_forward.1} parent=0 // pred_check_branch
    %17 = sbr.rel (0) target = $region17
  $region16: #{residual_block_forward.1} parent=0 // pred_region
    _
  $region17: #{residual_block_forward.1} parent=0 // pred_fallthru
    _
  // Predicated region
  $region18: #{residual_block_forward.1} parent=0 // pred_check
    _
  $region19: #{residual_block_forward.1} parent=0 // pred_check_branch
    %19 = sbr.rel (0) target = $region21
  $region20: #{residual_block_forward.1} parent=0 // pred_region
    _
  $region21: #{residual_block_forward.1} parent=0 // pred_fallthru
    _
  %v20 = vld [vmem:[%s0] sm:$0xff]
  %v21 = vld [vmem:[%s0 + $0x8] sm:$0xff]
  %v22 = vld [vmem:[%s0 + $0x10] sm:$0xff]
  %v23 = vld [vmem:[%s0 + $0x18] sm:$0xff]
  %v26 = vrot.slane %v20, 1
  %v27 = vrot.slane %v22, 1
  %vm32 = vcmask 1040384
  %v33 = vrot.slane %v20, 7
  %v34 = vrot.slane %v21, 7
  %v35 = vsel %vm32, %v33, %v34
  %v36 = vrot.slane %v22, 7
  %v37 = vrot.slane %v23, 7
  %v38 = vsel %vm32, %v36, %v37
  %v45 = vrot.slane %v21, 5
  %v46 = vrot.slane %v23, 5
  %v49 = vsel %vm32, %v26, %v33
  %v50 = vsel %vm32, %v27, %v36
  %v51 = vsel %vm32, %v34, %v45
  %v52 = vsel %vm32, %v37, %v46
  %v53 = vld [vmem:[%s1] sm:$0xff]
  %v54 = vld [vmem:[%s1 + $0x8] sm:$0xff]
  %v55 = vld [vmem:[%s1 + $0x10] sm:$0xff]
  %v56 = vld [vmem:[%s1 + $0x18] sm:$0xff]
  %v57 = vld [vmem:[%s1 + $0x20] sm:$0xff]
  %v58 = vld [vmem:[%s1 + $0x28] sm:$0xff]
  %v59 = vld [vmem:[%s1 + $0x30] sm:$0xff]
  %v60 = vld [vmem:[%s1 + $0x38] sm:$0xff]
  %v61 = vld [vmem:[%s1 + $0x40] sm:$0xff]
  %v62 = vld [vmem:[%s1 + $0x48] sm:$0xff]
  %v63 = vld [vmem:[%s1 + $0x50] sm:$0xff]
  %v64 = vld [vmem:[%s1 + $0x58] sm:$0xff]
  %v65 = vld [vmem:[%s1 + $0x60] sm:$0xff]
  %v66 = vld [vmem:[%s1 + $0x68] sm:$0xff]
  %v67 = vld [vmem:[%s1 + $0x70] sm:$0xff]
  %v68 = vld [vmem:[%s1 + $0x78] sm:$0xff]
  %vm73 = vcmask 1046528
  %v74 = vrot.slane %v49, 1
  %v75 = vrot.slane %v35, 1
  %v76 = vsel %vm73, %v74, %v75
  %v77 = vrot.slane %v51, 1
  %v78 = vsel %vm73, %v75, %v77
  %v79 = vrot.slane %v50, 1
  %v80 = vrot.slane %v38, 1
  %v81 = vsel %vm73, %v79, %v80
  %v82 = vrot.slane %v52, 1
  %v83 = vsel %vm73, %v80, %v82
  %s88 = scalar_lea.vmem %s1, 128
  %v89 = vld [vmem:[%s88] sm:$0xff]
  %v90 = vld [vmem:[%s88 + $0x8] sm:$0xff]
  %v91 = vld [vmem:[%s88 + $0x10] sm:$0xff]
  %v92 = vld [vmem:[%s88 + $0x18] sm:$0xff]
  %v93 = vld [vmem:[%s88 + $0x20] sm:$0xff]
  %v94 = vld [vmem:[%s88 + $0x28] sm:$0xff]
  %v95 = vld [vmem:[%s88 + $0x30] sm:$0xff]
  %v96 = vld [vmem:[%s88 + $0x38] sm:$0xff]
  %v97 = vld [vmem:[%s88 + $0x40] sm:$0xff]
  %v98 = vld [vmem:[%s88 + $0x48] sm:$0xff]
  %v99 = vld [vmem:[%s88 + $0x50] sm:$0xff]
  %v100 = vld [vmem:[%s88 + $0x58] sm:$0xff]
  %v101 = vld [vmem:[%s88 + $0x60] sm:$0xff]
  %v102 = vld [vmem:[%s88 + $0x68] sm:$0xff]
  %v103 = vld [vmem:[%s88 + $0x70] sm:$0xff]
  %v104 = vld [vmem:[%s88 + $0x78] sm:$0xff]
  %105 = vmatprep.subr.mxu0 0.0
  %106 = vmatpush1.msra.mxu0 %v89
  %107 = vmatprep.subr.mxu0 0.0
  %108 = vmatpush1.msra.mxu0 %v90
  %109 = vmatprep.subr.mxu0 0.0
  %110 = vmatpush1.msra.mxu0 %v91
  %111 = vmatprep.subr.mxu0 0.0
  %112 = vmatpush1.msra.mxu0 %v92
  %113 = vmatprep.subr.mxu0 0.0
  %114 = vmatpush1.msra.mxu0 %v93
  %115 = vmatprep.subr.mxu0 0.0
  %116 = vmatpush1.msra.mxu0 %v94
  %117 = vmatprep.subr.mxu0 0.0
  %118 = vmatpush1.msra.mxu0 %v95
  %119 = vmatprep.subr.mxu0 0.0
  %120 = vmatpush1.msra.mxu0 %v96
  %121 = vmatprep.subr.mxu0 0.0
  %122 = vmatpush1.msra.mxu0 %v97
  %123 = vmatprep.subr.mxu0 0.0
  %124 = vmatpush1.msra.mxu0 %v98
  %125 = vmatprep.subr.mxu0 0.0
  %126 = vmatpush1.msra.mxu0 %v99
  %127 = vmatprep.subr.mxu0 0.0
  %128 = vmatpush1.msra.mxu0 %v100
  %129 = vmatprep.subr.mxu0 0.0
  %130 = vmatpush1.msra.mxu0 %v101
  %131 = vmatprep.subr.mxu0 0.0
  %132 = vmatpush1.msra.mxu0 %v102
  %133 = vmatprep.subr.mxu0 0.0
  %134 = vmatpush1.msra.mxu0 %v103
  %135 = vmatprep.subr.mxu0 0.0
  %136 = vmatpush1.msra.mxu0 %v104
  %137 = vmatprep.subr.mxu0 0.0
  %138 = vmatpush1.msra.mxu0 0.0
  %139 = vmatprep.subr.mxu0 0.0
  %140 = vmatpush1.msra.mxu0 0.0
  %141 = vmatprep.subr.mxu0 0.0
  %142 = vmatpush1.msra.mxu0 0.0
  %143 = vmatprep.subr.mxu0 0.0
  %144 = vmatpush1.msra.mxu0 0.0
  %145 = vmatprep.subr.mxu0 0.0
  %146 = vmatpush1.msra.mxu0 0.0
  %147 = vmatprep.subr.mxu0 0.0
  %148 = vmatpush1.msra.mxu0 0.0
  %149 = vmatprep.subr.mxu0 0.0
  %150 = vmatpush1.msra.mxu0 0.0
  %151 = vmatprep.subr.mxu0 0.0
  %152 = vmatpush1.msra.mxu0 0.0
  %153 = vmatprep.subr.mxu0 0.0
  %154 = vmatpush1.msra.mxu0 0.0
  %155 = vmatprep.subr.mxu0 0.0
  %156 = vmatpush1.msra.mxu0 0.0
  %157 = vmatprep.subr.mxu0 0.0
  %158 = vmatpush1.msra.mxu0 0.0
  %159 = vmatprep.subr.mxu0 0.0
  %160 = vmatpush1.msra.mxu0 0.0
  %161 = vmatprep.subr.mxu0 0.0
  %162 = vmatpush1.msra.mxu0 0.0
  %163 = vmatprep.subr.mxu0 0.0
  %164 = vmatpush1.msra.mxu0 0.0
  %165 = vmatprep.subr.mxu0 0.0
  %166 = vmatpush1.msra.mxu0 0.0
  %167 = vmatprep.subr.mxu0 0.0
  %168 = vmatpush1.msra.mxu0 0.0
  %169 = vmatprep.mubr.f32.mxu0 0.0
  %170 = vmatmul.mubr.f32.gmra.mrb[0].mxu0 %v76
  %v171 = vpop.f32.mrb[0].mxu0
  %v172 = vadd.f32 0.0, %v171
  %v173 = vpop.f32.mrb[0].mxu0
  %174 = vmatprep.mubr.f32.mxu0 0.0
  %175 = vmatmul.mubr.f32.gmra.mrb[0].mxu0 %v78
  %v176 = vpop.f32.mrb[0].mxu0
  %v177 = vadd.f32 0.0, %v176
  %v178 = vpop.f32.mrb[0].mxu0
  %179 = vmatprep.mubr.f32.mxu0 0.0
  %180 = vmatmul.mubr.f32.gmra.mrb[0].mxu0 %v81
  %v181 = vpop.f32.mrb[0].mxu0
  %v182 = vadd.f32 0.0, %v181
  %v183 = vpop.f32.mrb[0].mxu0
  %184 = vmatprep.mubr.f32.mxu0 0.0
  %185 = vmatmul.mubr.f32.gmra.mrb[0].mxu0 %v83
  %v186 = vpop.f32.mrb[0].mxu0
  %v187 = vadd.f32 0.0, %v186
  %v188 = vpop.f32.mrb[0].mxu0
  %189 = vdwg.mxu0
  %190 = vmatprep.subr.mxu0 0.0
  %191 = vmatpush1.msra.mxu0 %v53
  %192 = vmatprep.subr.mxu0 0.0
  %193 = vmatpush1.msra.mxu0 %v54
  %194 = vmatprep.subr.mxu0 0.0
  %195 = vmatpush1.msra.mxu0 %v55
  %196 = vmatprep.subr.mxu0 0.0
  %197 = vmatpush1.msra.mxu0 %v56
  %198 = vmatprep.subr.mxu0 0.0
  %199 = vmatpush1.msra.mxu0 %v57
  %200 = vmatprep.subr.mxu0 0.0
  %201 = vmatpush1.msra.mxu0 %v58
  %202 = vmatprep.subr.mxu0 0.0
  %203 = vmatpush1.msra.mxu0 %v59
  %204 = vmatprep.subr.mxu0 0.0
  %205 = vmatpush1.msra.mxu0 %v60
  %206 = vmatprep.subr.mxu0 0.0
  %207 = vmatpush1.msra.mxu0 %v61
  %208 = vmatprep.subr.mxu0 0.0
  %209 = vmatpush1.msra.mxu0 %v62
  %210 = vmatprep.subr.mxu0 0.0
  %211 = vmatpush1.msra.mxu0 %v63
  %212 = vmatprep.subr.mxu0 0.0
  %213 = vmatpush1.msra.mxu0 %v64
  %214 = vmatprep.subr.mxu0 0.0
  %215 = vmatpush1.msra.mxu0 %v65
  %216 = vmatprep.subr.mxu0 0.0
  %217 = vmatpush1.msra.mxu0 %v66
  %218 = vmatprep.subr.mxu0 0.0
  %219 = vmatpush1.msra.mxu0 %v67
  %220 = vmatprep.subr.mxu0 0.0
  %221 = vmatpush1.msra.mxu0 %v68
  %222 = vmatprep.subr.mxu0 0.0
  %223 = vmatpush1.msra.mxu0 0.0
  %224 = vmatprep.subr.mxu0 0.0
  %225 = vmatpush1.msra.mxu0 0.0
  %226 = vmatprep.subr.mxu0 0.0
  %227 = vmatpush1.msra.mxu0 0.0
  %228 = vmatprep.subr.mxu0 0.0
  %229 = vmatpush1.msra.mxu0 0.0
  %230 = vmatprep.subr.mxu0 0.0
  %231 = vmatpush1.msra.mxu0 0.0
  %232 = vmatprep.subr.mxu0 0.0
  %233 = vmatpush1.msra.mxu0 0.0
  %234 = vmatprep.subr.mxu0 0.0
  %235 = vmatpush1.msra.mxu0 0.0
  %236 = vmatprep.subr.mxu0 0.0
  %237 = vmatpush1.msra.mxu0 0.0
  %238 = vmatprep.subr.mxu0 0.0
  %239 = vmatpush1.msra.mxu0 0.0
  %240 = vmatprep.subr.mxu0 0.0
  %241 = vmatpush1.msra.mxu0 0.0
  %242 = vmatprep.subr.mxu0 0.0
  %243 = vmatpush1.msra.mxu0 0.0
  %244 = vmatprep.subr.mxu0 0.0
  %245 = vmatpush1.msra.mxu0 0.0
  %246 = vmatprep.subr.mxu0 0.0
  %247 = vmatpush1.msra.mxu0 0.0
  %248 = vmatprep.subr.mxu0 0.0
  %249 = vmatpush1.msra.mxu0 0.0
  %250 = vmatprep.subr.mxu0 0.0
  %251 = vmatpush1.msra.mxu0 0.0
  %252 = vmatprep.subr.mxu0 0.0
  %253 = vmatpush1.msra.mxu0 0.0
  %254 = vmatprep.mubr.f32.mxu0 0.0
  %255 = vmatmul.mubr.f32.gmra.mrb[0].mxu0 %v49
  %v256 = vpop.f32.mrb[0].mxu0
  %v257 = vadd.f32 %v172, %v256
  %v258 = vpop.f32.mrb[0].mxu0
  %259 = vmatprep.mubr.f32.mxu0 0.0
  %260 = vmatmul.mubr.f32.gmra.mrb[0].mxu0 %v35
  %v261 = vpop.f32.mrb[0].mxu0
  %v262 = vadd.f32 %v177, %v261
  %v263 = vpop.f32.mrb[0].mxu0
  %264 = vmatprep.mubr.f32.mxu0 0.0
  %265 = vmatmul.mubr.f32.gmra.mrb[0].mxu0 %v50
  %v266 = vpop.f32.mrb[0].mxu0
  %v267 = vadd.f32 %v182, %v266
  %v268 = vpop.f32.mrb[0].mxu0
  %269 = vmatprep.mubr.f32.mxu0 0.0
  %270 = vmatmul.mubr.f32.gmra.mrb[0].mxu0 %v38
  %v271 = vpop.f32.mrb[0].mxu0
  %v272 = vadd.f32 %v187, %v271
  %v273 = vpop.f32.mrb[0].mxu0
  %274 = vdwg.mxu0
  %vm275 = vcmask 1045504
  %v276 = vrot.slane %v49, 2
  %v277 = vrot.slane %v35, 2
  %v278 = vsel %vm275, %v276, %v277
  %v279 = vrot.slane %v51, 2
  %v280 = vsel %vm275, %v277, %v279
  %v281 = vrot.slane %v50, 2
  %v282 = vrot.slane %v38, 2
  %v283 = vsel %vm275, %v281, %v282
  %v284 = vrot.slane %v52, 2
  %v285 = vsel %vm275, %v282, %v284
  %s290 = scalar_lea.vmem %s1, 256
  %v291 = vld [vmem:[%s290] sm:$0xff]
  %v292 = vld [vmem:[%s290 + $0x8] sm:$0xff]
  %v293 = vld [vmem:[%s290 + $0x10] sm:$0xff]
  %v294 = vld [vmem:[%s290 + $0x18] sm:$0xff]
  %v295 = vld [vmem:[%s290 + $0x20] sm:$0xff]
  %v296 = vld [vmem:[%s290 + $0x28] sm:$0xff]
  %v297 = vld [vmem:[%s290 + $0x30] sm:$0xff]
  %v298 = vld [vmem:[%s290 + $0x38] sm:$0xff]
  %v299 = vld [vmem:[%s290 + $0x40] sm:$0xff]
  %v300 = vld [vmem:[%s290 + $0x48] sm:$0xff]
  %v301 = vld [vmem:[%s290 + $0x50] sm:$0xff]
  %v302 = vld [vmem:[%s290 + $0x58] sm:$0xff]
  %v303 = vld [vmem:[%s290 + $0x60] sm:$0xff]
  %v304 = vld [vmem:[%s290 + $0x68] sm:$0xff]
  %v305 = vld [vmem:[%s290 + $0x70] sm:$0xff]
  %v306 = vld [vmem:[%s290 + $0x78] sm:$0xff]
  %307 = vmatprep.subr.mxu0 0.0
  %308 = vmatpush1.msra.mxu0 %v291
  %309 = vmatprep.subr.mxu0 0.0
  %310 = vmatpush1.msra.mxu0 %v292
  %311 = vmatprep.subr.mxu0 0.0
  %312 = vmatpush1.msra.mxu0 %v293
  %313 = vmatprep.subr.mxu0 0.0
  %314 = vmatpush1.msra.mxu0 %v294
  %315 = vmatprep.subr.mxu0 0.0
  %316 = vmatpush1.msra.mxu0 %v295
  %317 = vmatprep.subr.mxu0 0.0
  %318 = vmatpush1.msra.mxu0 %v296
  %319 = vmatprep.subr.mxu0 0.0
  %320 = vmatpush1.msra.mxu0 %v297
  %321 = vmatprep.subr.mxu0 0.0
  %322 = vmatpush1.msra.mxu0 %v298
  %323 = vmatprep.subr.mxu0 0.0
  %324 = vmatpush1.msra.mxu0 %v299
  %325 = vmatprep.subr.mxu0 0.0
  %326 = vmatpush1.msra.mxu0 %v300
  %327 = vmatprep.subr.mxu0 0.0
  %328 = vmatpush1.msra.mxu0 %v301
  %329 = vmatprep.subr.mxu0 0.0
  %330 = vmatpush1.msra.mxu0 %v302
  %331 = vmatprep.subr.mxu0 0.0
  %332 = vmatpush1.msra.mxu0 %v303
  %333 = vmatprep.subr.mxu0 0.0
  %334 = vmatpush1.msra.mxu0 %v304
  %335 = vmatprep.subr.mxu0 0.0
  %336 = vmatpush1.msra.mxu0 %v305
  %337 = vmatprep.subr.mxu0 0.0
  %338 = vmatpush1.msra.mxu0 %v306
  %339 = vmatprep.subr.mxu0 0.0
  %340 = vmatpush1.msra.mxu0 0.0
  %341 = vmatprep.subr.mxu0 0.0
  %342 = vmatpush1.msra.mxu0 0.0
  %343 = vmatprep.subr.mxu0 0.0
  %344 = vmatpush1.msra.mxu0 0.0
  %345 = vmatprep.subr.mxu0 0.0
  %346 = vmatpush1.msra.mxu0 0.0
  %347 = vmatprep.subr.mxu0 0.0
  %348 = vmatpush1.msra.mxu0 0.0
  %349 = vmatprep.subr.mxu0 0.0
  %350 = vmatpush1.msra.mxu0 0.0
  %351 = vmatprep.subr.mxu0 0.0
  %352 = vmatpush1.msra.mxu0 0.0
  %353 = vmatprep.subr.mxu0 0.0
  %354 = vmatpush1.msra.mxu0 0.0
  %355 = vmatprep.subr.mxu0 0.0
  %356 = vmatpush1.msra.mxu0 0.0
  %357 = vmatprep.subr.mxu0 0.0
  %358 = vmatpush1.msra.mxu0 0.0
  %359 = vmatprep.subr.mxu0 0.0
  %360 = vmatpush1.msra.mxu0 0.0
  %361 = vmatprep.subr.mxu0 0.0
  %362 = vmatpush1.msra.mxu0 0.0
  %363 = vmatprep.subr.mxu0 0.0
  %364 = vmatpush1.msra.mxu0 0.0
  %365 = vmatprep.subr.mxu0 0.0
  %366 = vmatpush1.msra.mxu0 0.0
  %367 = vmatprep.subr.mxu0 0.0
  %368 = vmatpush1.msra.mxu0 0.0
  %369 = vmatprep.subr.mxu0 0.0
  %370 = vmatpush1.msra.mxu0 0.0
  %371 = vmatprep.mubr.f32.mxu0 0.0
  %372 = vmatmul.mubr.f32.gmra.mrb[0].mxu0 %v278
  %v373 = vpop.f32.mrb[0].mxu0
  %v374 = vadd.f32 0.0, %v373
  %v375 = vpop.f32.mrb[0].mxu0
  %376 = vmatprep.mubr.f32.mxu0 0.0
  %377 = vmatmul.mubr.f32.gmra.mrb[0].mxu0 %v280
  %v378 = vpop.f32.mrb[0].mxu0
  %v379 = vadd.f32 0.0, %v378
  %v380 = vpop.f32.mrb[0].mxu0
  %381 = vmatprep.mubr.f32.mxu0 0.0
  %382 = vmatmul.mubr.f32.gmra.mrb[0].mxu0 %v283
  %v383 = vpop.f32.mrb[0].mxu0
  %v384 = vadd.f32 0.0, %v383
  %v385 = vpop.f32.mrb[0].mxu0
  %386 = vmatprep.mubr.f32.mxu0 0.0
  %387 = vmatmul.mubr.f32.gmra.mrb[0].mxu0 %v285
  %v388 = vpop.f32.mrb[0].mxu0
  %v389 = vadd.f32 0.0, %v388
  %v390 = vpop.f32.mrb[0].mxu0
  %391 = vdwg.mxu0
  %v392 = vadd.f32 %v257, %v374
  %v393 = vadd.f32 %v262, %v379
  %v394 = vadd.f32 %v267, %v384
  %v395 = vadd.f32 %v272, %v389
  %v396 = vld [vmem:[%s2] sm:$0x1]
  %v398 = vlaneseq
  %v399 = vshrl.u32 %v398, 7
  %v400 = vsub.s32 0, %v399
  %v401 = vrot.slane %v396, %v400
  %v403 = vadd.f32 %v392, %v401
  %v404 = vadd.f32 %v393, %v401
  %v405 = vadd.f32 %v394, %v401
  %v406 = vadd.f32 %v395, %v401
  %v407 = vmax.f32 %v403, 0.0
  %v408 = vmax.f32 %v404, 0.0
  %v409 = vmax.f32 %v405, 0.0
  %v410 = vmax.f32 %v406, 0.0
  %v413 = vrot.slane %v407, 1
  %v414 = vrot.slane %v409, 1
  %v419 = vrot.slane %v407, 7
  %v420 = vrot.slane %v408, 7
  %v421 = vsel %vm32, %v419, %v420
  %v422 = vrot.slane %v409, 7
  %v423 = vrot.slane %v410, 7
  %v424 = vsel %vm32, %v422, %v423
  %v431 = vrot.slane %v408, 5
  %v432 = vrot.slane %v410, 5
  %v435 = vsel %vm32, %v413, %v419
  %v436 = vsel %vm32, %v414, %v422
  %v437 = vsel %vm32, %v420, %v431
  %v438 = vsel %vm32, %v423, %v432
  %v439 = vld [vmem:[%s3] sm:$0xff]
  %v440 = vld [vmem:[%s3 + $0x8] sm:$0xff]
  %v441 = vld [vmem:[%s3 + $0x10] sm:$0xff]
  %v442 = vld [vmem:[%s3 + $0x18] sm:$0xff]
  %v443 = vld [vmem:[%s3 + $0x20] sm:$0xff]
  %v444 = vld [vmem:[%s3 + $0x28] sm:$0xff]
  %v445 = vld [vmem:[%s3 + $0x30] sm:$0xff]
  %v446 = vld [vmem:[%s3 + $0x38] sm:$0xff]
  %v447 = vld [vmem:[%s3 + $0x40] sm:$0xff]
  %v448 = vld [vmem:[%s3 + $0x48] sm:$0xff]
  %v449 = vld [vmem:[%s3 + $0x50] sm:$0xff]
  %v450 = vld [vmem:[%s3 + $0x58] sm:$0xff]
  %v451 = vld [vmem:[%s3 + $0x60] sm:$0xff]
  %v452 = vld [vmem:[%s3 + $0x68] sm:$0xff]
  %v453 = vld [vmem:[%s3 + $0x70] sm:$0xff]
  %v454 = vld [vmem:[%s3 + $0x78] sm:$0xff]
  %v459 = vrot.slane %v435, 1
  %v460 = vrot.slane %v421, 1
  %v461 = vsel %vm73, %v459, %v460
  %v462 = vrot.slane %v437, 1
  %v463 = vsel %vm73, %v460, %v462
  %v464 = vrot.slane %v436, 1
  %v465 = vrot.slane %v424, 1
  %v466 = vsel %vm73, %v464, %v465
  %v467 = vrot.slane %v438, 1
  %v468 = vsel %vm73, %v465, %v467
  %s473 = scalar_lea.vmem %s3, 128
  %v474 = vld [vmem:[%s473] sm:$0xff]
  %v475 = vld [vmem:[%s473 + $0x8] sm:$0xff]
  %v476 = vld [vmem:[%s473 + $0x10] sm:$0xff]
  %v477 = vld [vmem:[%s473 + $0x18] sm:$0xff]
  %v478 = vld [vmem:[%s473 + $0x20] sm:$0xff]
  %v479 = vld [vmem:[%s473 + $0x28] sm:$0xff]
  %v480 = vld [vmem:[%s473 + $0x30] sm:$0xff]
  %v481 = vld [vmem:[%s473 + $0x38] sm:$0xff]
  %v482 = vld [vmem:[%s473 + $0x40] sm:$0xff]
  %v483 = vld [vmem:[%s473 + $0x48] sm:$0xff]
  %v484 = vld [vmem:[%s473 + $0x50] sm:$0xff]
  %v485 = vld [vmem:[%s473 + $0x58] sm:$0xff]
  %v486 = vld [vmem:[%s473 + $0x60] sm:$0xff]
  %v487 = vld [vmem:[%s473 + $0x68] sm:$0xff]
  %v488 = vld [vmem:[%s473 + $0x70] sm:$0xff]
  %v489 = vld [vmem:[%s473 + $0x78] sm:$0xff]
  %490 = vmatprep.subr.mxu0 0.0
  %491 = vmatpush1.msra.mxu0 %v474
  %492 = vmatprep.subr.mxu0 0.0
  %493 = vmatpush1.msra.mxu0 %v475
  %494 = vmatprep.subr.mxu0 0.0
  %495 = vmatpush1.msra.mxu0 %v476
  %496 = vmatprep.subr.mxu0 0.0
  %497 = vmatpush1.msra.mxu0 %v477
  %498 = vmatprep.subr.mxu0 0.0
  %499 = vmatpush1.msra.mxu0 %v478
  %500 = vmatprep.subr.mxu0 0.0
  %501 = vmatpush1.msra.mxu0 %v479
  %502 = vmatprep.subr.mxu0 0.0
  %503 = vmatpush1.msra.mxu0 %v480
  %504 = vmatprep.subr.mxu0 0.0
  %505 = vmatpush1.msra.mxu0 %v481
  %506 = vmatprep.subr.mxu0 0.0
  %507 = vmatpush1.msra.mxu0 %v482
  %508 = vmatprep.subr.mxu0 0.0
  %509 = vmatpush1.msra.mxu0 %v483
  %510 = vmatprep.subr.mxu0 0.0
  %511 = vmatpush1.msra.mxu0 %v484
  %512 = vmatprep.subr.mxu0 0.0
  %513 = vmatpush1.msra.mxu0 %v485
  %514 = vmatprep.subr.mxu0 0.0
  %515 = vmatpush1.msra.mxu0 %v486
  %516 = vmatprep.subr.mxu0 0.0
  %517 = vmatpush1.msra.mxu0 %v487
  %518 = vmatprep.subr.mxu0 0.0
  %519 = vmatpush1.msra.mxu0 %v488
  %520 = vmatprep.subr.mxu0 0.0
  %521 = vmatpush1.msra.mxu0 %v489
  %522 = vmatprep.subr.mxu0 0.0
  %523 = vmatpush1.msra.mxu0 0.0
  %524 = vmatprep.subr.mxu0 0.0
  %525 = vmatpush1.msra.mxu0 0.0
  %526 = vmatprep.subr.mxu0 0.0
  %527 = vmatpush1.msra.mxu0 0.0
  %528 = vmatprep.subr.mxu0 0.0
  %529 = vmatpush1.msra.mxu0 0.0
  %530 = vmatprep.subr.mxu0 0.0
  %531 = vmatpush1.msra.mxu0 0.0
  %532 = vmatprep.subr.mxu0 0.0
  %533 = vmatpush1.msra.mxu0 0.0
  %534 = vmatprep.subr.mxu0 0.0
  %535 = vmatpush1.msra.mxu0 0.0
  %536 = vmatprep.subr.mxu0 0.0
  %537 = vmatpush1.msra.mxu0 0.0
  %538 = vmatprep.subr.mxu0 0.0
  %539 = vmatpush1.msra.mxu0 0.0
  %540 = vmatprep.subr.mxu0 0.0
  %541 = vmatpush1.msra.mxu0 0.0
  %542 = vmatprep.subr.mxu0 0.0
  %543 = vmatpush1.msra.mxu0 0.0
  %544 = vmatprep.subr.mxu0 0.0
  %545 = vmatpush1.msra.mxu0 0.0
  %546 = vmatprep.subr.mxu0 0.0
  %547 = vmatpush1.msra.mxu0 0.0
  %548 = vmatprep.subr.mxu0 0.0
  %549 = vmatpush1.msra.mxu0 0.0
  %550 = vmatprep.subr.mxu0 0.0
  %551 = vmatpush1.msra.mxu0 0.0
  %552 = vmatprep.subr.mxu0 0.0
  %553 = vmatpush1.msra.mxu0 0.0
  %554 = vmatprep.mubr.f32.mxu0 0.0
  %555 = vmatmul.mubr.f32.gmra.mrb[0].mxu0 %v461
  %v556 = vpop.f32.mrb[0].mxu0
  %v557 = vadd.f32 0.0, %v556
  %v558 = vpop.f32.mrb[0].mxu0
  %559 = vmatprep.mubr.f32.mxu0 0.0
  %560 = vmatmul.mubr.f32.gmra.mrb[0].mxu0 %v463
  %v561 = vpop.f32.mrb[0].mxu0
  %v562 = vadd.f32 0.0, %v561
  %v563 = vpop.f32.mrb[0].mxu0
  %564 = vmatprep.mubr.f32.mxu0 0.0
  %565 = vmatmul.mubr.f32.gmra.mrb[0].mxu0 %v466
  %v566 = vpop.f32.mrb[0].mxu0
  %v567 = vadd.f32 0.0, %v566
  %v568 = vpop.f32.mrb[0].mxu0
  %569 = vmatprep.mubr.f32.mxu0 0.0
  %570 = vmatmul.mubr.f32.gmra.mrb[0].mxu0 %v468
  %v571 = vpop.f32.mrb[0].mxu0
  %v572 = vadd.f32 0.0, %v571
  %v573 = vpop.f32.mrb[0].mxu0
  %574 = vdwg.mxu0
  %575 = vmatprep.subr.mxu0 0.0
  %576 = vmatpush1.msra.mxu0 %v439
  %577 = vmatprep.subr.mxu0 0.0
  %578 = vmatpush1.msra.mxu0 %v440
  %579 = vmatprep.subr.mxu0 0.0
  %580 = vmatpush1.msra.mxu0 %v441
  %581 = vmatprep.subr.mxu0 0.0
  %582 = vmatpush1.msra.mxu0 %v442
  %583 = vmatprep.subr.mxu0 0.0
  %584 = vmatpush1.msra.mxu0 %v443
  %585 = vmatprep.subr.mxu0 0.0
  %586 = vmatpush1.msra.mxu0 %v444
  %587 = vmatprep.subr.mxu0 0.0
  %588 = vmatpush1.msra.mxu0 %v445
  %589 = vmatprep.subr.mxu0 0.0
  %590 = vmatpush1.msra.mxu0 %v446
  %591 = vmatprep.subr.mxu0 0.0
  %592 = vmatpush1.msra.mxu0 %v447
  %593 = vmatprep.subr.mxu0 0.0
  %594 = vmatpush1.msra.mxu0 %v448
  %595 = vmatprep.subr.mxu0 0.0
  %596 = vmatpush1.msra.mxu0 %v449
  %597 = vmatprep.subr.mxu0 0.0
  %598 = vmatpush1.msra.mxu0 %v450
  %599 = vmatprep.subr.mxu0 0.0
  %600 = vmatpush1.msra.mxu0 %v451
  %601 = vmatprep.subr.mxu0 0.0
  %602 = vmatpush1.msra.mxu0 %v452
  %603 = vmatprep.subr.mxu0 0.0
  %604 = vmatpush1.msra.mxu0 %v453
  %605 = vmatprep.subr.mxu0 0.0
  %606 = vmatpush1.msra.mxu0 %v454
  %607 = vmatprep.subr.mxu0 0.0
  %608 = vmatpush1.msra.mxu0 0.0
  %609 = vmatprep.subr.mxu0 0.0
  %610 = vmatpush1.msra.mxu0 0.0
  %611 = vmatprep.subr.mxu0 0.0
  %612 = vmatpush1.msra.mxu0 0.0
  %613 = vmatprep.subr.mxu0 0.0
  %614 = vmatpush1.msra.mxu0 0.0
  %615 = vmatprep.subr.mxu0 0.0
  %616 = vmatpush1.msra.mxu0 0.0
  %617 = vmatprep.subr.mxu0 0.0
  %618 = vmatpush1.msra.mxu0 0.0
  %619 = vmatprep.subr.mxu0 0.0
  %620 = vmatpush1.msra.mxu0 0.0
  %621 = vmatprep.subr.mxu0 0.0
  %622 = vmatpush1.msra.mxu0 0.0
  %623 = vmatprep.subr.mxu0 0.0
  %624 = vmatpush1.msra.mxu0 0.0
  %625 = vmatprep.subr.mxu0 0.0
  %626 = vmatpush1.msra.mxu0 0.0
  %627 = vmatprep.subr.mxu0 0.0
  %628 = vmatpush1.msra.mxu0 0.0
  %629 = vmatprep.subr.mxu0 0.0
  %630 = vmatpush1.msra.mxu0 0.0
  %631 = vmatprep.subr.mxu0 0.0
  %632 = vmatpush1.msra.mxu0 0.0
  %633 = vmatprep.subr.mxu0 0.0
  %634 = vmatpush1.msra.mxu0 0.0
  %635 = vmatprep.subr.mxu0 0.0
  %636 = vmatpush1.msra.mxu0 0.0
  %637 = vmatprep.subr.mxu0 0.0
  %638 = vmatpush1.msra.mxu0 0.0
  %639 = vmatprep.mubr.f32.mxu0 0.0
  %640 = vmatmul.mubr.f32.gmra.mrb[0].mxu0 %v435
  %v641 = vpop.f32.mrb[0].mxu0
  %v642 = vadd.f32 %v557, %v641
  %v643 = vpop.f32.mrb[0].mxu0
  %644 = vmatprep.mubr.f32.mxu0 0.0
  %645 = vmatmul.mubr.f32.gmra.mrb[0].mxu0 %v421
  %v646 = vpop.f32.mrb[0].mxu0
  %v647 = vadd.f32 %v562, %v646
  %v648 = vpop.f32.mrb[0].mxu0
  %649 = vmatprep.mubr.f32.mxu0 0.0
  %650 = vmatmul.mubr.f32.gmra.mrb[0].mxu0 %v436
  %v651 = vpop.f32.mrb[0].mxu0
  %v652 = vadd.f32 %v567, %v651
  %v653 = vpop.f32.mrb[0].mxu0
  %654 = vmatprep.mubr.f32.mxu0 0.0
  %655 = vmatmul.mubr.f32.gmra.mrb[0].mxu0 %v424
  %v656 = vpop.f32.mrb[0].mxu0
  %v657 = vadd.f32 %v572, %v656
  %v658 = vpop.f32.mrb[0].mxu0
  %659 = vdwg.mxu0
  %v660 = vrot.slane %v435, 2
  %v661 = vrot.slane %v421, 2
  %v662 = vsel %vm275, %v660, %v661
  %v663 = vrot.slane %v437, 2
  %v664 = vsel %vm275, %v661, %v663
  %v665 = vrot.slane %v436, 2
  %v666 = vrot.slane %v424, 2
  %v667 = vsel %vm275, %v665, %v666
  %v668 = vrot.slane %v438, 2
  %v669 = vsel %vm275, %v666, %v668
  %s674 = scalar_lea.vmem %s3, 256
  %v675 = vld [vmem:[%s674] sm:$0xff]
  %v676 = vld [vmem:[%s674 + $0x8] sm:$0xff]
  %v677 = vld [vmem:[%s674 + $0x10] sm:$0xff]
  %v678 = vld [vmem:[%s674 + $0x18] sm:$0xff]
  %v679 = vld [vmem:[%s674 + $0x20] sm:$0xff]
  %v680 = vld [vmem:[%s674 + $0x28] sm:$0xff]
  %v681 = vld [vmem:[%s674 + $0x30] sm:$0xff]
  %v682 = vld [vmem:[%s674 + $0x38] sm:$0xff]
  %v683 = vld [vmem:[%s674 + $0x40] sm:$0xff]
  %v684 = vld [vmem:[%s674 + $0x48] sm:$0xff]
  %v685 = vld [vmem:[%s674 + $0x50] sm:$0xff]
  %v686 = vld [vmem:[%s674 + $0x58] sm:$0xff]
  %v687 = vld [vmem:[%s674 + $0x60] sm:$0xff]
  %v688 = vld [vmem:[%s674 + $0x68] sm:$0xff]
  %v689 = vld [vmem:[%s674 + $0x70] sm:$0xff]
  %v690 = vld [vmem:[%s674 + $0x78] sm:$0xff]
  %691 = vmatprep.subr.mxu0 0.0
  %692 = vmatpush1.msra.mxu0 %v675
  %693 = vmatprep.subr.mxu0 0.0
  %694 = vmatpush1.msra.mxu0 %v676
  %695 = vmatprep.subr.mxu0 0.0
  %696 = vmatpush1.msra.mxu0 %v677
  %697 = vmatprep.subr.mxu0 0.0
  %698 = vmatpush1.msra.mxu0 %v678
  %699 = vmatprep.subr.mxu0 0.0
  %700 = vmatpush1.msra.mxu0 %v679
  %701 = vmatprep.subr.mxu0 0.0
  %702 = vmatpush1.msra.mxu0 %v680
  %703 = vmatprep.subr.mxu0 0.0
  %704 = vmatpush1.msra.mxu0 %v681
  %705 = vmatprep.subr.mxu0 0.0
  %706 = vmatpush1.msra.mxu0 %v682
  %707 = vmatprep.subr.mxu0 0.0
  %708 = vmatpush1.msra.mxu0 %v683
  %709 = vmatprep.subr.mxu0 0.0
  %710 = vmatpush1.msra.mxu0 %v684
  %711 = vmatprep.subr.mxu0 0.0
  %712 = vmatpush1.msra.mxu0 %v685
  %713 = vmatprep.subr.mxu0 0.0
  %714 = vmatpush1.msra.mxu0 %v686
  %715 = vmatprep.subr.mxu0 0.0
  %716 = vmatpush1.msra.mxu0 %v687
  %717 = vmatprep.subr.mxu0 0.0
  %718 = vmatpush1.msra.mxu0 %v688
  %719 = vmatprep.subr.mxu0 0.0
  %720 = vmatpush1.msra.mxu0 %v689
  %721 = vmatprep.subr.mxu0 0.0
  %722 = vmatpush1.msra.mxu0 %v690
  %723 = vmatprep.subr.mxu0 0.0
  %724 = vmatpush1.msra.mxu0 0.0
  %725 = vmatprep.subr.mxu0 0.0
  %726 = vmatpush1.msra.mxu0 0.0
  %727 = vmatprep.subr.mxu0 0.0
  %728 = vmatpush1.msra.mxu0 0.0
  %729 = vmatprep.subr.mxu0 0.0
  %730 = vmatpush1.msra.mxu0 0.0
  %731 = vmatprep.subr.mxu0 0.0
  %732 = vmatpush1.msra.mxu0 0.0
  %733 = vmatprep.subr.mxu0 0.0
  %734 = vmatpush1.msra.mxu0 0.0
  %735 = vmatprep.subr.mxu0 0.0
  %736 = vmatpush1.msra.mxu0 0.0
  %737 = vmatprep.subr.mxu0 0.0
  %738 = vmatpush1.msra.mxu0 0.0
  %739 = vmatprep.subr.mxu0 0.0
  %740 = vmatpush1.msra.mxu0 0.0
  %741 = vmatprep.subr.mxu0 0.0
  %742 = vmatpush1.msra.mxu0 0.0
  %743 = vmatprep.subr.mxu0 0.0
  %744 = vmatpush1.msra.mxu0 0.0
  %745 = vmatprep.subr.mxu0 0.0
  %746 = vmatpush1.msra.mxu0 0.0
  %747 = vmatprep.subr.mxu0 0.0
  %748 = vmatpush1.msra.mxu0 0.0
  %749 = vmatprep.subr.mxu0 0.0
  %750 = vmatpush1.msra.mxu0 0.0
  %751 = vmatprep.subr.mxu0 0.0
  %752 = vmatpush1.msra.mxu0 0.0
  %753 = vmatprep.subr.mxu0 0.0
  %754 = vmatpush1.msra.mxu0 0.0
  %755 = vmatprep.mubr.f32.mxu0 0.0
  %756 = vmatmul.mubr.f32.gmra.mrb[0].mxu0 %v662
  %v757 = vpop.f32.mrb[0].mxu0
  %v758 = vadd.f32 0.0, %v757
  %v759 = vpop.f32.mrb[0].mxu0
  %760 = vmatprep.mubr.f32.mxu0 0.0
  %761 = vmatmul.mubr.f32.gmra.mrb[0].mxu0 %v664
  %v762 = vpop.f32.mrb[0].mxu0
  %v763 = vadd.f32 0.0, %v762
  %v764 = vpop.f32.mrb[0].mxu0
  %765 = vmatprep.mubr.f32.mxu0 0.0
  %766 = vmatmul.mubr.f32.gmra.mrb[0].mxu0 %v667
  %v767 = vpop.f32.mrb[0].mxu0
  %v768 = vadd.f32 0.0, %v767
  %v769 = vpop.f32.mrb[0].mxu0
  %770 = vmatprep.mubr.f32.mxu0 0.0
  %771 = vmatmul.mubr.f32.gmra.mrb[0].mxu0 %v669
  %v772 = vpop.f32.mrb[0].mxu0
  %v773 = vadd.f32 0.0, %v772
  %v774 = vpop.f32.mrb[0].mxu0
  %775 = vdwg.mxu0
  %v776 = vadd.f32 %v642, %v758
  %v777 = vadd.f32 %v647, %v763
  %v778 = vadd.f32 %v652, %v768
  %v779 = vadd.f32 %v657, %v773
  %v780 = vld [vmem:[%s4] sm:$0x1]
  %v782 = vlaneseq
  %v783 = vshrl.u32 %v782, 7
  %v784 = vsub.s32 0, %v783
  %v785 = vrot.slane %v780, %v784
  %v787 = vadd.f32 %v776, %v785
  %v788 = vadd.f32 %v777, %v785
  %v789 = vadd.f32 %v778, %v785
  %v790 = vadd.f32 %v779, %v785
  %v791 = vmul.f32 %v787, 2.0
  %v792 = vmul.f32 %v788, 2.0
  %v793 = vmul.f32 %v789, 2.0
  %v794 = vmul.f32 %v790, 2.0
  %795 = vst [vmem:[%s5] sm:$0xff] %v791
  %796 = vst [vmem:[%s5 + $0x8] sm:$0xff] %v792
  %797 = vst [vmem:[%s5 + $0x10] sm:$0xff] %v793
  %798 = vst [vmem:[%s5 + $0x18] sm:$0xff] %v794
  // Predicated region
  $region22: #{residual_block_forward.1} parent=0 // pred_check
    _
  $region23: #{residual_block_forward.1} parent=0 // pred_check_branch
    %800 = sbr.rel (0) target = $region25
  $region24: #{residual_block_forward.1} parent=0 // pred_region
    _
  $region25: #{residual_block_forward.1} parent=0 // pred_fallthru
    _
  // Predicated region
  $region26: #{residual_block_forward.1} parent=0 // pred_check
    _
  $region27: #{residual_block_forward.1} parent=0 // pred_check_branch
    %802 = sbr.rel (0) target = $region29
  $region28: #{residual_block_forward.1} parent=0 // pred_region
    _
  $region29: #{residual_block_forward.1} parent=0 // pred_fallthru
    _

</llo_original>
